<compile_context>
chip_gen: v7x
topology: tpu7x:2x2x1
jax: 0.10.0
libtpu: 0.0.40
codegen_flags: <defaults>
</compile_context>

<pallas_src>
import functools

import jax
import jax.numpy as jnp
from jax.experimental import pallas as pl
from jax.experimental.pallas import tpu as pltpu

N_FIELDS = 6  # top_left_x, top_left_y, bottom_right_x, bottom_right_y, width, height


def _round_up(x, m):
    return (x + m - 1) // m * m


def spatial_kernel(coords_ref, tables_ref, out_ref):
    # coords_ref: (TM, 6) int32       -- one tile of flattened (B*S, 6) coords
    # tables_ref: (6, Vp, Dp)         -- all 6 tables, VMEM-resident (constant)
    # out_ref:    (TM, Dp)
    tm = coords_ref.shape[0]
    vp = tables_ref.shape[1]
    dp = tables_ref.shape[2]

    coords = coords_ref[...]                                   # (TM, 6) i32
    # Built once per grid step, reused by all 6 field compares.
    iota = jax.lax.broadcasted_iota(jnp.int32, (tm, vp), 1)    # (TM, Vp)

    acc = jnp.zeros((tm, dp), jnp.float32)
    for k in range(N_FIELDS):
        tab_k = tables_ref[k]                                  # (Vp, Dp)
        # Mask math stays bool/int; cast to the MXU dtype only right before
        # the dot (keeps v5e's f32-only VPU out of bf16 elementwise work).
        onehot = (iota == coords[:, k][:, None]).astype(tab_k.dtype)
        acc = acc + jnp.dot(onehot, tab_k, preferred_element_type=jnp.float32)

    out_ref[...] = acc.astype(out_ref.dtype)


@functools.partial(
    jax.jit,
    static_argnames=("tm", "force_pallas", "table_dtype", "out_dtype"))
def spatial_module_forward(coordinates, tables, *, tm=256, force_pallas=False,
                           table_dtype=jnp.bfloat16, out_dtype=jnp.float32):
    """coordinates: int32 [B, S, 6]; tables: float32 [6, V, D] -> [B, S, D]."""
    B, S, C = coordinates.shape
    n_tab, V, D = tables.shape
    assert C == N_FIELDS and n_tab == N_FIELDS

    tables = tables.astype(table_dtype)
    BS = B * S

    # Tiny workloads: the Pallas launch is pure fixed overhead -- fall back to
    # a plain XLA gather+add (same bf16-storage / f32-accumulate semantics).
    if BS < 4 * 128 and not force_pallas:
        out = jnp.zeros((B, S, D), jnp.float32)
        for k in range(N_FIELDS):
            out = out + tables[k][coordinates[..., k]].astype(jnp.float32)
        return out.astype(out_dtype)

    tab_itemsize = jnp.dtype(table_dtype).itemsize
    out_itemsize = jnp.dtype(out_dtype).itemsize

    # Pad V only to the sublane tile (16 for bf16, 8 for f32); pad D to 128 so
    # the output store is lane-dense.  No-ops for production-size tables.
    sublane = 16 if tab_itemsize == 2 else 8
    Vp = _round_up(V, sublane)
    Dp = _round_up(D, 128)

    # Clamp the row tile to the (8-aligned) row count so small inputs do not
    # pad most of the M tile; production BS just uses tm (256 default; sweep
    # 128 on v5e).
    tm_eff = max(8, min(tm, _round_up(BS, 8)))
    BSp = _round_up(BS, tm_eff)

    # Flatten rows; padded coord rows read index 0 (harmless, sliced away).
    coords_flat = coordinates.reshape(BS, C).astype(jnp.int32)
    coords_flat = jnp.pad(coords_flat, ((0, BSp - BS), (0, 0)))

    # Zero-pad each table slab; coords >= V land on zero rows (contribute 0).
    tab = jnp.pad(tables, ((0, 0), (0, Vp - V), (0, Dp - D)))

    tables_bytes = N_FIELDS * Vp * Dp * tab_itemsize
    # Single-buffer the constant tables operand once it is big enough for the
    # second (useless) pipeline buffer to matter; its index_map is constant.
    tab_spec_kwargs = {}
    if tables_bytes > (1 << 20):
        tab_spec_kwargs["pipeline_mode"] = pl.Buffered(1)
    tab_spec = pl.BlockSpec((N_FIELDS, Vp, Dp), lambda i: (0, 0, 0),
                            **tab_spec_kwargs)
    n_tab_buf = 1 if tab_spec_kwargs else 2

    # VMEM budget estimate: tables buffers + double-buffered coords/out tiles
    # + in-kernel temps (iota, one-hot, f32 accumulator).
    vmem_est = (n_tab_buf * tables_bytes
                + 2 * tm_eff * C * 4
                + 2 * tm_eff * Dp * out_itemsize
                + tm_eff * Vp * (4 + tab_itemsize)
                + tm_eff * Dp * 4)
    vmem_limit = None
    if vmem_est > 12 * (1 << 20):  # above v5e's 16 MiB scoped default
        vmem_limit = int(min(vmem_est * 3 // 2, 64 * (1 << 20)))

    grid = (BSp // tm_eff,)
    flops = 2 * BSp * (N_FIELDS * Vp) * Dp
    bytes_accessed = (coords_flat.size * 4 + tab.size * tab_itemsize
                      + BSp * Dp * out_itemsize)

    out = pl.pallas_call(
        spatial_kernel,
        out_shape=jax.ShapeDtypeStruct((BSp, Dp), out_dtype),
        grid_spec=pltpu.PrefetchScalarGridSpec(
            num_scalar_prefetch=0,
            grid=grid,
            in_specs=[
                pl.BlockSpec((tm_eff, C), lambda i: (i, 0)),   # row tile of coords
                tab_spec,                                      # all tables (constant)
            ],
            out_specs=pl.BlockSpec((tm_eff, Dp), lambda i: (i, 0)),
        ),
        compiler_params=pltpu.CompilerParams(
            dimension_semantics=("parallel",),
            vmem_limit_bytes=vmem_limit),
        cost_estimate=pl.CostEstimate(
            flops=flops, transcendentals=0, bytes_accessed=bytes_accessed),
    )(coords_flat, tab)

    return out[:BS, :D].reshape(B, S, D)


if __name__ == "__main__":
    # Config: max_2d_position_embeddings = 32, d_model = 32
    B, S, V, D = 2, 8, 32, 32

    key = jax.random.PRNGKey(0)
    k_tab, k_coord = jax.random.split(key)

    # Deterministic parameter init (nn.Embedding default: N(0, 1)).
    # Stacked order: [top_left_x, top_left_y, bottom_right_x, bottom_right_y,
    #                 width_emb, height_emb]
    tables = jax.random.normal(k_tab, (N_FIELDS, V, D), dtype=jnp.float32)
    coordinates = jax.random.randint(k_coord, (B, S, N_FIELDS), 0, V,
                                     dtype=jnp.int32)

    # Force the Pallas path so the kernel itself is exercised at this size.
    out = spatial_module_forward(coordinates, tables, force_pallas=True)
    out = jax.block_until_ready(out)

    # Reference in plain JAX (same semantics as the PyTorch forward); tables
    # are compared after the same bf16 storage rounding the kernel applies.
    tab_ref = tables.astype(jnp.bfloat16).astype(jnp.float32)
    ref = jnp.zeros((B, S, D), jnp.float32)
    for k in range(N_FIELDS):
        ref = ref + tab_ref[k][coordinates[:, :, k]]

    assert out.shape == (B, S, D)
    assert jnp.allclose(out, ref, atol=1e-4, rtol=1e-4), "pallas path mismatch"

    # Also check the small-workload XLA dispatch path.
    out_small = jax.block_until_ready(spatial_module_forward(coordinates, tables))
    assert jnp.allclose(out_small, ref, atol=1e-4, rtol=1e-4), "xla path mismatch"

    print("KERNEL_OK")
</pallas_src>

<mosaic_0001>
module attributes {stable_mosaic.version = 11 : i64} {
  func.func @spatial_kernel(%arg0: i32, %arg1: memref<16x6xi32, #tpu.memory_space<vmem>>, %arg2: memref<6x32x128xbf16, #tpu.memory_space<vmem>>, %arg3: memref<16x128xf32, #tpu.memory_space<vmem>>) attributes {dimension_semantics = [#tpu.dimension_semantics<parallel>], iteration_bounds = array<i64: 1>, scalar_prefetch = 0 : i64, scratch_operands = 0 : i64, tpu.core_type = #tpu.core_type<tc>, window_params = [{transform_indices = @transform_0, window_bounds = array<i64: 16, 6>}, {pipeline_mode = #tpu.pipeline_mode<synchronous>, transform_indices = @transform_1, window_bounds = array<i64: 6, 32, 128>}, {transform_indices = @transform_2, window_bounds = array<i64: 16, 128>}]} {
    %c0 = arith.constant 0 : index
    %c0_0 = arith.constant 0 : index
    %0 = vector.load %arg1[%c0, %c0_0] : memref<16x6xi32, #tpu.memory_space<vmem>>, vector<16x6xi32>
    %1 = tpu.iota {dimensions = array<i32: 1>} : vector<16x32xi32>
    %cst = arith.constant 0.000000e+00 : f32
    %2 = vector.broadcast %cst : f32 to vector<16x128xf32>
    %c0_1 = arith.constant 0 : index
    %c0_2 = arith.constant 0 : index
    %c0_3 = arith.constant 0 : index
    %3 = vector.load %arg2[%c0_1, %c0_2, %c0_3] : memref<6x32x128xbf16, #tpu.memory_space<vmem>>, vector<1x32x128xbf16>
    %4 = vector.shape_cast %3 : vector<1x32x128xbf16> to vector<32x128xbf16>
    %5 = vector.extract_strided_slice %0 {offsets = [0, 0], sizes = [16, 1], strides = [1, 1]} : vector<16x6xi32> to vector<16x1xi32>
    %6 = vector.shape_cast %5 : vector<16x1xi32> to vector<16xi32>
    %7 = vector.shape_cast %6 : vector<16xi32> to vector<16x1xi32>
    %8 = vector.broadcast %7 : vector<16x1xi32> to vector<16x32xi32>
    %9 = arith.cmpi eq, %1, %8 : vector<16x32xi32>
    %10 = arith.extui %9 : vector<16x32xi1> to vector<16x32xi32>
    %11 = arith.sitofp %10 : vector<16x32xi32> to vector<16x32xf32>
    %12 = arith.truncf %11 : vector<16x32xf32> to vector<16x32xbf16>
    %cst_4 = arith.constant dense<0.000000e+00> : vector<16x128xf32>
    %13 = tpu.matmul %12, %4, %cst_4 {dimension_numbers = #tpu.dot_dimension_numbers<[1], [0], [0], [1], [0, 0, 1, 1], [], []>} : vector<16x32xbf16>, vector<32x128xbf16>, vector<16x128xf32> -> vector<16x128xf32>
    %14 = arith.addf %2, %13 : vector<16x128xf32>
    %c1 = arith.constant 1 : index
    %c0_5 = arith.constant 0 : index
    %c0_6 = arith.constant 0 : index
    %15 = vector.load %arg2[%c1, %c0_5, %c0_6] : memref<6x32x128xbf16, #tpu.memory_space<vmem>>, vector<1x32x128xbf16>
    %16 = vector.shape_cast %15 : vector<1x32x128xbf16> to vector<32x128xbf16>
    %17 = vector.extract_strided_slice %0 {offsets = [0, 1], sizes = [16, 1], strides = [1, 1]} : vector<16x6xi32> to vector<16x1xi32>
    %18 = vector.shape_cast %17 : vector<16x1xi32> to vector<16xi32>
    %19 = vector.shape_cast %18 : vector<16xi32> to vector<16x1xi32>
    %20 = vector.broadcast %19 : vector<16x1xi32> to vector<16x32xi32>
    %21 = arith.cmpi eq, %1, %20 : vector<16x32xi32>
    %22 = arith.extui %21 : vector<16x32xi1> to vector<16x32xi32>
    %23 = arith.sitofp %22 : vector<16x32xi32> to vector<16x32xf32>
    %24 = arith.truncf %23 : vector<16x32xf32> to vector<16x32xbf16>
    %cst_7 = arith.constant dense<0.000000e+00> : vector<16x128xf32>
    %25 = tpu.matmul %24, %16, %cst_7 {dimension_numbers = #tpu.dot_dimension_numbers<[1], [0], [0], [1], [0, 0, 1, 1], [], []>} : vector<16x32xbf16>, vector<32x128xbf16>, vector<16x128xf32> -> vector<16x128xf32>
    %26 = arith.addf %14, %25 : vector<16x128xf32>
    %c2 = arith.constant 2 : index
    %c0_8 = arith.constant 0 : index
    %c0_9 = arith.constant 0 : index
    %27 = vector.load %arg2[%c2, %c0_8, %c0_9] : memref<6x32x128xbf16, #tpu.memory_space<vmem>>, vector<1x32x128xbf16>
    %28 = vector.shape_cast %27 : vector<1x32x128xbf16> to vector<32x128xbf16>
    %29 = vector.extract_strided_slice %0 {offsets = [0, 2], sizes = [16, 1], strides = [1, 1]} : vector<16x6xi32> to vector<16x1xi32>
    %30 = vector.shape_cast %29 : vector<16x1xi32> to vector<16xi32>
    %31 = vector.shape_cast %30 : vector<16xi32> to vector<16x1xi32>
    %32 = vector.broadcast %31 : vector<16x1xi32> to vector<16x32xi32>
    %33 = arith.cmpi eq, %1, %32 : vector<16x32xi32>
    %34 = arith.extui %33 : vector<16x32xi1> to vector<16x32xi32>
    %35 = arith.sitofp %34 : vector<16x32xi32> to vector<16x32xf32>
    %36 = arith.truncf %35 : vector<16x32xf32> to vector<16x32xbf16>
    %cst_10 = arith.constant dense<0.000000e+00> : vector<16x128xf32>
    %37 = tpu.matmul %36, %28, %cst_10 {dimension_numbers = #tpu.dot_dimension_numbers<[1], [0], [0], [1], [0, 0, 1, 1], [], []>} : vector<16x32xbf16>, vector<32x128xbf16>, vector<16x128xf32> -> vector<16x128xf32>
    %38 = arith.addf %26, %37 : vector<16x128xf32>
    %c3 = arith.constant 3 : index
    %c0_11 = arith.constant 0 : index
    %c0_12 = arith.constant 0 : index
    %39 = vector.load %arg2[%c3, %c0_11, %c0_12] : memref<6x32x128xbf16, #tpu.memory_space<vmem>>, vector<1x32x128xbf16>
    %40 = vector.shape_cast %39 : vector<1x32x128xbf16> to vector<32x128xbf16>
    %41 = vector.extract_strided_slice %0 {offsets = [0, 3], sizes = [16, 1], strides = [1, 1]} : vector<16x6xi32> to vector<16x1xi32>
    %42 = vector.shape_cast %41 : vector<16x1xi32> to vector<16xi32>
    %43 = vector.shape_cast %42 : vector<16xi32> to vector<16x1xi32>
    %44 = vector.broadcast %43 : vector<16x1xi32> to vector<16x32xi32>
    %45 = arith.cmpi eq, %1, %44 : vector<16x32xi32>
    %46 = arith.extui %45 : vector<16x32xi1> to vector<16x32xi32>
    %47 = arith.sitofp %46 : vector<16x32xi32> to vector<16x32xf32>
    %48 = arith.truncf %47 : vector<16x32xf32> to vector<16x32xbf16>
    %cst_13 = arith.constant dense<0.000000e+00> : vector<16x128xf32>
    %49 = tpu.matmul %48, %40, %cst_13 {dimension_numbers = #tpu.dot_dimension_numbers<[1], [0], [0], [1], [0, 0, 1, 1], [], []>} : vector<16x32xbf16>, vector<32x128xbf16>, vector<16x128xf32> -> vector<16x128xf32>
    %50 = arith.addf %38, %49 : vector<16x128xf32>
    %c4 = arith.constant 4 : index
    %c0_14 = arith.constant 0 : index
    %c0_15 = arith.constant 0 : index
    %51 = vector.load %arg2[%c4, %c0_14, %c0_15] : memref<6x32x128xbf16, #tpu.memory_space<vmem>>, vector<1x32x128xbf16>
    %52 = vector.shape_cast %51 : vector<1x32x128xbf16> to vector<32x128xbf16>
    %53 = vector.extract_strided_slice %0 {offsets = [0, 4], sizes = [16, 1], strides = [1, 1]} : vector<16x6xi32> to vector<16x1xi32>
    %54 = vector.shape_cast %53 : vector<16x1xi32> to vector<16xi32>
    %55 = vector.shape_cast %54 : vector<16xi32> to vector<16x1xi32>
    %56 = vector.broadcast %55 : vector<16x1xi32> to vector<16x32xi32>
    %57 = arith.cmpi eq, %1, %56 : vector<16x32xi32>
    %58 = arith.extui %57 : vector<16x32xi1> to vector<16x32xi32>
    %59 = arith.sitofp %58 : vector<16x32xi32> to vector<16x32xf32>
    %60 = arith.truncf %59 : vector<16x32xf32> to vector<16x32xbf16>
    %cst_16 = arith.constant dense<0.000000e+00> : vector<16x128xf32>
    %61 = tpu.matmul %60, %52, %cst_16 {dimension_numbers = #tpu.dot_dimension_numbers<[1], [0], [0], [1], [0, 0, 1, 1], [], []>} : vector<16x32xbf16>, vector<32x128xbf16>, vector<16x128xf32> -> vector<16x128xf32>
    %62 = arith.addf %50, %61 : vector<16x128xf32>
    %c5 = arith.constant 5 : index
    %c0_17 = arith.constant 0 : index
    %c0_18 = arith.constant 0 : index
    %63 = vector.load %arg2[%c5, %c0_17, %c0_18] : memref<6x32x128xbf16, #tpu.memory_space<vmem>>, vector<1x32x128xbf16>
    %64 = vector.shape_cast %63 : vector<1x32x128xbf16> to vector<32x128xbf16>
    %65 = vector.extract_strided_slice %0 {offsets = [0, 5], sizes = [16, 1], strides = [1, 1]} : vector<16x6xi32> to vector<16x1xi32>
    %66 = vector.shape_cast %65 : vector<16x1xi32> to vector<16xi32>
    %67 = vector.shape_cast %66 : vector<16xi32> to vector<16x1xi32>
    %68 = vector.broadcast %67 : vector<16x1xi32> to vector<16x32xi32>
    %69 = arith.cmpi eq, %1, %68 : vector<16x32xi32>
    %70 = arith.extui %69 : vector<16x32xi1> to vector<16x32xi32>
    %71 = arith.sitofp %70 : vector<16x32xi32> to vector<16x32xf32>
    %72 = arith.truncf %71 : vector<16x32xf32> to vector<16x32xbf16>
    %cst_19 = arith.constant dense<0.000000e+00> : vector<16x128xf32>
    %73 = tpu.matmul %72, %64, %cst_19 {dimension_numbers = #tpu.dot_dimension_numbers<[1], [0], [0], [1], [0, 0, 1, 1], [], []>} : vector<16x32xbf16>, vector<32x128xbf16>, vector<16x128xf32> -> vector<16x128xf32>
    %74 = arith.addf %62, %73 : vector<16x128xf32>
    %c0_20 = arith.constant 0 : index
    %c0_21 = arith.constant 0 : index
    %75 = vector.load %arg3[%c0_20, %c0_21] : memref<16x128xf32, #tpu.memory_space<vmem>>, vector<16x128xf32>
    tpu.vector_store %arg3[%c0_20, %c0_21], %74 {strides = array<i32>} : memref<16x128xf32, #tpu.memory_space<vmem>>, vector<16x128xf32>,
    return
  }
  func.func @transform_0(%arg0: i32) -> (i32, i32) {
    %c0_i32 = arith.constant 0 : i32
    %c0_i32_0 = arith.constant 0 : i32
    return %arg0, %c0_i32 : i32, i32
  }
  func.func @transform_1(%arg0: i32) -> (i32, i32, i32) {
    %c0_i32 = arith.constant 0 : i32
    %c0_i32_0 = arith.constant 0 : i32
    %c0_i32_1 = arith.constant 0 : i32
    %c0_i32_2 = arith.constant 0 : i32
    return %c0_i32, %c0_i32_0, %c0_i32_1 : i32, i32, i32
  }
  func.func @transform_2(%arg0: i32) -> (i32, i32) {
    %c0_i32 = arith.constant 0 : i32
    %c0_i32_0 = arith.constant 0 : i32
    return %arg0, %c0_i32 : i32, i32
  }
}

</mosaic_0001>

<llo_original>
// kernel: spatial_module_forward.1
$region0: #{spatial_module_forward.1}
  #allocation0 [shape = 'u32[]', space=smem, size = 0x4, offset = 0x4, fixed_abs, tag = 'smem constant byte address 0x4 - core index']
  #allocation1 [shape = 'u32[144,128]{1,0:T(1,128)}', space=vmem, size = 0x12000, scoped, tag = 'internal scratch']
  %s0 = inlined_call_operand.vmem [shape: s32[16,6], index: 0, kind: input, shape index: {}]
  %s1 = inlined_call_operand.vmem [shape: bf16[6,32,128], index: 1, kind: input, shape index: {}]
  %s2 = inlined_call_operand.vmem [shape: f32[16,128], index: 2, kind: output, shape index: {}]
  %s3 = sld [smem:[#allocation0]]
  $region18: #{spatial_module_forward.1} parent=0
    _
  %s5 = ssub.s32 1, %s3
  %s6 = scalar_select 0, %s5, %s3
  // Predicated region
  $region2: #{spatial_module_forward.1} parent=0 // pred_check
    _
  $region3: #{spatial_module_forward.1} parent=0 // pred_check_branch
    %8 = sbr.rel (0) target = $region5
  $region4: #{spatial_module_forward.1} parent=0 // pred_region
    _
  $region5: #{spatial_module_forward.1} parent=0 // pred_fallthru
    _
  // Predicated region
  $region6: #{spatial_module_forward.1} parent=0 // pred_check
    _
  $region7: #{spatial_module_forward.1} parent=0 // pred_check_branch
    %10 = sbr.rel (0) target = $region9
  $region8: #{spatial_module_forward.1} parent=0 // pred_region
    _
  $region9: #{spatial_module_forward.1} parent=0 // pred_fallthru
    _
  %v12 = vld [vmem:[%s0] sm:$0xff]
  %v13 = vld [vmem:[%s0 + $0x8] sm:$0xff]
  %v14 = vlaneseq
  %v15 = vand.u32 %v14, 127
  %v16 = vld [vmem:[%s1] sm:$0xf]
  %v17 = vld [vmem:[%s1 + $0x4] sm:$0xf]
  %v18 = vld [vmem:[%s1 + $0x8] sm:$0xf]
  %v19 = vld [vmem:[%s1 + $0xc] sm:$0xf]
  %20 = vset.pattern.permute.xlu0 0
  %21 = vperm.xlu0 %20, %v12
  %v22 = vpop.permute.xlu0 %21
  %23 = vset.pattern.permute.xlu0 0
  %24 = vperm.xlu0 %23, %v13
  %v25 = vpop.permute.xlu0 %24
  %vm26 = vcmp.eq.s32.totalorder %v15, %v22
  %vm27 = vcmp.eq.s32.totalorder %v15, %v25
  %v28 = vsel %vm26, 1, 0
  %v29 = vsel %vm27, 1, 0
  %v30 = vcvt.s32.f32 %v28
  %v31 = vcvt.s32.f32 %v29
  %v32 = vpack.c.bf16 %v31, %v30
  %s33 = scalar_lea.vmem %s1, 16
  %v34 = vld [vmem:[%s33] sm:$0xf]
  %v35 = vld [vmem:[%s33 + $0x4] sm:$0xf]
  %v36 = vld [vmem:[%s33 + $0x8] sm:$0xf]
  %v37 = vld [vmem:[%s33 + $0xc] sm:$0xf]
  %38 = vset.pattern.permute.xlu0 1
  %39 = vperm.xlu0 %38, %v12
  %v40 = vpop.permute.xlu0 %39
  %41 = vset.pattern.permute.xlu0 1
  %42 = vperm.xlu0 %41, %v13
  %v43 = vpop.permute.xlu0 %42
  %vm44 = vcmp.eq.s32.totalorder %v15, %v40
  %vm45 = vcmp.eq.s32.totalorder %v15, %v43
  %v46 = vsel %vm44, 1, 0
  %v47 = vsel %vm45, 1, 0
  %v48 = vcvt.s32.f32 %v46
  %v49 = vcvt.s32.f32 %v47
  %v50 = vpack.c.bf16 %v49, %v48
  %v55 = vunpack.c.l.b16 %v34
  %v56 = vunpack.c.l.b16 %v35
  %v57 = vunpack.c.l.b16 %v36
  %v58 = vunpack.c.l.b16 %v37
  %v59 = vpack.c.b16 %v56, %v55
  %v60 = vpack.c.b16 %v58, %v57
  %vm63 = vcmask 261120
  %v65 = vsel %vm63, %v50, 0
  %67 = vmatprep.subr.bf16.mxu0 0
  %68 = vmatpush1.bf16.msra.mxu0 %v59
  %69 = vmatprep.subr.bf16.mxu0 0
  %70 = vmatpush1.bf16.msra.mxu0 %v60
  %71 = vmatprep.subr.bf16.mxu0 0
  %72 = vmatpush1.bf16.msra.mxu0 0
  %73 = vmatprep.subr.bf16.mxu0 0
  %74 = vmatpush1.bf16.msra.mxu0 0
  %75 = vmatprep.subr.bf16.mxu0 0
  %76 = vmatpush1.bf16.msra.mxu0 0
  %77 = vmatprep.subr.bf16.mxu0 0
  %78 = vmatpush1.bf16.msra.mxu0 0
  %79 = vmatprep.subr.bf16.mxu0 0
  %80 = vmatpush1.bf16.msra.mxu0 0
  %81 = vmatprep.subr.bf16.mxu0 0
  %82 = vmatpush1.bf16.msra.mxu0 0
  %83 = vmatprep.subr.bf16.mxu0 0
  %84 = vmatpush1.bf16.msra.mxu0 0
  %85 = vmatprep.subr.bf16.mxu0 0
  %86 = vmatpush1.bf16.msra.mxu0 0
  %87 = vmatprep.subr.bf16.mxu0 0
  %88 = vmatpush1.bf16.msra.mxu0 0
  %89 = vmatprep.subr.bf16.mxu0 0
  %90 = vmatpush1.bf16.msra.mxu0 0
  %91 = vmatprep.subr.bf16.mxu0 0
  %92 = vmatpush1.bf16.msra.mxu0 0
  %93 = vmatprep.subr.bf16.mxu0 0
  %94 = vmatpush1.bf16.msra.mxu0 0
  %95 = vmatprep.subr.bf16.mxu0 0
  %96 = vmatpush1.bf16.msra.mxu0 0
  %97 = vmatprep.subr.bf16.mxu0 0
  %98 = vmatpush1.bf16.msra.mxu0 0
  %99 = vmatprep.mubr.bf16.mxu0 0
  %100 = vmatmul.mubr.bf16.gmra.mrb[0].mxu0 %v65
  %v101 = vpop.f32.mrb[0].mxu0
  %v102 = vadd.f32 0.0, %v101
  %v103 = vpop.f32.mrb[0].mxu0
  %v104 = vpop.f32.mrb[0].mxu0
  %v105 = vadd.f32 0.0, %v104
  %v106 = vpop.f32.mrb[0].mxu0
  %107 = vdwg.mxu0
  %v112 = vunpack.c.l.b16 %v16
  %v113 = vunpack.c.l.b16 %v17
  %v114 = vunpack.c.l.b16 %v18
  %v115 = vunpack.c.l.b16 %v19
  %v116 = vpack.c.b16 %v113, %v112
  %v117 = vpack.c.b16 %v115, %v114
  %v121 = vsel %vm63, %v32, 0
  %123 = vmatprep.subr.bf16.mxu0 0
  %124 = vmatpush1.bf16.msra.mxu0 %v116
  %125 = vmatprep.subr.bf16.mxu0 0
  %126 = vmatpush1.bf16.msra.mxu0 %v117
  %127 = vmatprep.subr.bf16.mxu0 0
  %128 = vmatpush1.bf16.msra.mxu0 0
  %129 = vmatprep.subr.bf16.mxu0 0
  %130 = vmatpush1.bf16.msra.mxu0 0
  %131 = vmatprep.subr.bf16.mxu0 0
  %132 = vmatpush1.bf16.msra.mxu0 0
  %133 = vmatprep.subr.bf16.mxu0 0
  %134 = vmatpush1.bf16.msra.mxu0 0
  %135 = vmatprep.subr.bf16.mxu0 0
  %136 = vmatpush1.bf16.msra.mxu0 0
  %137 = vmatprep.subr.bf16.mxu0 0
  %138 = vmatpush1.bf16.msra.mxu0 0
  %139 = vmatprep.subr.bf16.mxu0 0
  %140 = vmatpush1.bf16.msra.mxu0 0
  %141 = vmatprep.subr.bf16.mxu0 0
  %142 = vmatpush1.bf16.msra.mxu0 0
  %143 = vmatprep.subr.bf16.mxu0 0
  %144 = vmatpush1.bf16.msra.mxu0 0
  %145 = vmatprep.subr.bf16.mxu0 0
  %146 = vmatpush1.bf16.msra.mxu0 0
  %147 = vmatprep.subr.bf16.mxu0 0
  %148 = vmatpush1.bf16.msra.mxu0 0
  %149 = vmatprep.subr.bf16.mxu0 0
  %150 = vmatpush1.bf16.msra.mxu0 0
  %151 = vmatprep.subr.bf16.mxu0 0
  %152 = vmatpush1.bf16.msra.mxu0 0
  %153 = vmatprep.subr.bf16.mxu0 0
  %154 = vmatpush1.bf16.msra.mxu0 0
  %155 = vmatprep.mubr.bf16.mxu0 0
  %156 = vmatmul.mubr.bf16.gmra.mrb[0].mxu0 %v121
  %v157 = vpop.f32.mrb[0].mxu0
  %v158 = vadd.f32 %v102, %v157
  %v159 = vpop.f32.mrb[0].mxu0
  %v160 = vpop.f32.mrb[0].mxu0
  %v161 = vadd.f32 %v105, %v160
  %v162 = vpop.f32.mrb[0].mxu0
  %163 = vdwg.mxu0
  %s164 = scalar_lea.vmem %s1, 32
  %v165 = vld [vmem:[%s164] sm:$0xf]
  %v166 = vld [vmem:[%s164 + $0x4] sm:$0xf]
  %v167 = vld [vmem:[%s164 + $0x8] sm:$0xf]
  %v168 = vld [vmem:[%s164 + $0xc] sm:$0xf]
  %169 = vset.pattern.permute.xlu0 2
  %170 = vperm.xlu0 %169, %v12
  %v171 = vpop.permute.xlu0 %170
  %172 = vset.pattern.permute.xlu0 2
  %173 = vperm.xlu0 %172, %v13
  %v174 = vpop.permute.xlu0 %173
  %vm175 = vcmp.eq.s32.totalorder %v15, %v171
  %vm176 = vcmp.eq.s32.totalorder %v15, %v174
  %v177 = vsel %vm175, 1, 0
  %v178 = vsel %vm176, 1, 0
  %v179 = vcvt.s32.f32 %v177
  %v180 = vcvt.s32.f32 %v178
  %v181 = vpack.c.bf16 %v180, %v179
  %v186 = vunpack.c.l.b16 %v165
  %v187 = vunpack.c.l.b16 %v166
  %v188 = vunpack.c.l.b16 %v167
  %v189 = vunpack.c.l.b16 %v168
  %v190 = vpack.c.b16 %v187, %v186
  %v191 = vpack.c.b16 %v189, %v188
  %v195 = vsel %vm63, %v181, 0
  %197 = vmatprep.subr.bf16.mxu0 0
  %198 = vmatpush1.bf16.msra.mxu0 %v190
  %199 = vmatprep.subr.bf16.mxu0 0
  %200 = vmatpush1.bf16.msra.mxu0 %v191
  %201 = vmatprep.subr.bf16.mxu0 0
  %202 = vmatpush1.bf16.msra.mxu0 0
  %203 = vmatprep.subr.bf16.mxu0 0
  %204 = vmatpush1.bf16.msra.mxu0 0
  %205 = vmatprep.subr.bf16.mxu0 0
  %206 = vmatpush1.bf16.msra.mxu0 0
  %207 = vmatprep.subr.bf16.mxu0 0
  %208 = vmatpush1.bf16.msra.mxu0 0
  %209 = vmatprep.subr.bf16.mxu0 0
  %210 = vmatpush1.bf16.msra.mxu0 0
  %211 = vmatprep.subr.bf16.mxu0 0
  %212 = vmatpush1.bf16.msra.mxu0 0
  %213 = vmatprep.subr.bf16.mxu0 0
  %214 = vmatpush1.bf16.msra.mxu0 0
  %215 = vmatprep.subr.bf16.mxu0 0
  %216 = vmatpush1.bf16.msra.mxu0 0
  %217 = vmatprep.subr.bf16.mxu0 0
  %218 = vmatpush1.bf16.msra.mxu0 0
  %219 = vmatprep.subr.bf16.mxu0 0
  %220 = vmatpush1.bf16.msra.mxu0 0
  %221 = vmatprep.subr.bf16.mxu0 0
  %222 = vmatpush1.bf16.msra.mxu0 0
  %223 = vmatprep.subr.bf16.mxu0 0
  %224 = vmatpush1.bf16.msra.mxu0 0
  %225 = vmatprep.subr.bf16.mxu0 0
  %226 = vmatpush1.bf16.msra.mxu0 0
  %227 = vmatprep.subr.bf16.mxu0 0
  %228 = vmatpush1.bf16.msra.mxu0 0
  %229 = vmatprep.mubr.bf16.mxu0 0
  %230 = vmatmul.mubr.bf16.gmra.mrb[0].mxu0 %v195
  %v231 = vpop.f32.mrb[0].mxu0
  %v232 = vadd.f32 0.0, %v231
  %v233 = vpop.f32.mrb[0].mxu0
  %v234 = vpop.f32.mrb[0].mxu0
  %v235 = vadd.f32 0.0, %v234
  %v236 = vpop.f32.mrb[0].mxu0
  %237 = vdwg.mxu0
  %v238 = vadd.f32 %v158, %v232
  %v239 = vadd.f32 %v161, %v235
  %s240 = scalar_lea.vmem %s1, 48
  %v241 = vld [vmem:[%s240] sm:$0xf]
  %v242 = vld [vmem:[%s240 + $0x4] sm:$0xf]
  %v243 = vld [vmem:[%s240 + $0x8] sm:$0xf]
  %v244 = vld [vmem:[%s240 + $0xc] sm:$0xf]
  %245 = vset.pattern.permute.xlu0 3
  %246 = vperm.xlu0 %245, %v12
  %v247 = vpop.permute.xlu0 %246
  %248 = vset.pattern.permute.xlu0 3
  %249 = vperm.xlu0 %248, %v13
  %v250 = vpop.permute.xlu0 %249
  %vm251 = vcmp.eq.s32.totalorder %v15, %v247
  %vm252 = vcmp.eq.s32.totalorder %v15, %v250
  %v253 = vsel %vm251, 1, 0
  %v254 = vsel %vm252, 1, 0
  %v255 = vcvt.s32.f32 %v253
  %v256 = vcvt.s32.f32 %v254
  %v257 = vpack.c.bf16 %v256, %v255
  %v262 = vunpack.c.l.b16 %v241
  %v263 = vunpack.c.l.b16 %v242
  %v264 = vunpack.c.l.b16 %v243
  %v265 = vunpack.c.l.b16 %v244
  %v266 = vpack.c.b16 %v263, %v262
  %v267 = vpack.c.b16 %v265, %v264
  %v271 = vsel %vm63, %v257, 0
  %273 = vmatprep.subr.bf16.mxu0 0
  %274 = vmatpush1.bf16.msra.mxu0 %v266
  %275 = vmatprep.subr.bf16.mxu0 0
  %276 = vmatpush1.bf16.msra.mxu0 %v267
  %277 = vmatprep.subr.bf16.mxu0 0
  %278 = vmatpush1.bf16.msra.mxu0 0
  %279 = vmatprep.subr.bf16.mxu0 0
  %280 = vmatpush1.bf16.msra.mxu0 0
  %281 = vmatprep.subr.bf16.mxu0 0
  %282 = vmatpush1.bf16.msra.mxu0 0
  %283 = vmatprep.subr.bf16.mxu0 0
  %284 = vmatpush1.bf16.msra.mxu0 0
  %285 = vmatprep.subr.bf16.mxu0 0
  %286 = vmatpush1.bf16.msra.mxu0 0
  %287 = vmatprep.subr.bf16.mxu0 0
  %288 = vmatpush1.bf16.msra.mxu0 0
  %289 = vmatprep.subr.bf16.mxu0 0
  %290 = vmatpush1.bf16.msra.mxu0 0
  %291 = vmatprep.subr.bf16.mxu0 0
  %292 = vmatpush1.bf16.msra.mxu0 0
  %293 = vmatprep.subr.bf16.mxu0 0
  %294 = vmatpush1.bf16.msra.mxu0 0
  %295 = vmatprep.subr.bf16.mxu0 0
  %296 = vmatpush1.bf16.msra.mxu0 0
  %297 = vmatprep.subr.bf16.mxu0 0
  %298 = vmatpush1.bf16.msra.mxu0 0
  %299 = vmatprep.subr.bf16.mxu0 0
  %300 = vmatpush1.bf16.msra.mxu0 0
  %301 = vmatprep.subr.bf16.mxu0 0
  %302 = vmatpush1.bf16.msra.mxu0 0
  %303 = vmatprep.subr.bf16.mxu0 0
  %304 = vmatpush1.bf16.msra.mxu0 0
  %305 = vmatprep.mubr.bf16.mxu0 0
  %306 = vmatmul.mubr.bf16.gmra.mrb[0].mxu0 %v271
  %v307 = vpop.f32.mrb[0].mxu0
  %v308 = vadd.f32 0.0, %v307
  %v309 = vpop.f32.mrb[0].mxu0
  %v310 = vpop.f32.mrb[0].mxu0
  %v311 = vadd.f32 0.0, %v310
  %v312 = vpop.f32.mrb[0].mxu0
  %313 = vdwg.mxu0
  %v314 = vadd.f32 %v238, %v308
  %v315 = vadd.f32 %v239, %v311
  %s316 = scalar_lea.vmem %s1, 64
  %v317 = vld [vmem:[%s316] sm:$0xf]
  %v318 = vld [vmem:[%s316 + $0x4] sm:$0xf]
  %v319 = vld [vmem:[%s316 + $0x8] sm:$0xf]
  %v320 = vld [vmem:[%s316 + $0xc] sm:$0xf]
  %321 = vset.pattern.permute.xlu0 4
  %322 = vperm.xlu0 %321, %v12
  %v323 = vpop.permute.xlu0 %322
  %324 = vset.pattern.permute.xlu0 4
  %325 = vperm.xlu0 %324, %v13
  %v326 = vpop.permute.xlu0 %325
  %vm327 = vcmp.eq.s32.totalorder %v15, %v323
  %vm328 = vcmp.eq.s32.totalorder %v15, %v326
  %v329 = vsel %vm327, 1, 0
  %v330 = vsel %vm328, 1, 0
  %v331 = vcvt.s32.f32 %v329
  %v332 = vcvt.s32.f32 %v330
  %v333 = vpack.c.bf16 %v332, %v331
  %v338 = vunpack.c.l.b16 %v317
  %v339 = vunpack.c.l.b16 %v318
  %v340 = vunpack.c.l.b16 %v319
  %v341 = vunpack.c.l.b16 %v320
  %v342 = vpack.c.b16 %v339, %v338
  %v343 = vpack.c.b16 %v341, %v340
  %v347 = vsel %vm63, %v333, 0
  %349 = vmatprep.subr.bf16.mxu0 0
  %350 = vmatpush1.bf16.msra.mxu0 %v342
  %351 = vmatprep.subr.bf16.mxu0 0
  %352 = vmatpush1.bf16.msra.mxu0 %v343
  %353 = vmatprep.subr.bf16.mxu0 0
  %354 = vmatpush1.bf16.msra.mxu0 0
  %355 = vmatprep.subr.bf16.mxu0 0
  %356 = vmatpush1.bf16.msra.mxu0 0
  %357 = vmatprep.subr.bf16.mxu0 0
  %358 = vmatpush1.bf16.msra.mxu0 0
  %359 = vmatprep.subr.bf16.mxu0 0
  %360 = vmatpush1.bf16.msra.mxu0 0
  %361 = vmatprep.subr.bf16.mxu0 0
  %362 = vmatpush1.bf16.msra.mxu0 0
  %363 = vmatprep.subr.bf16.mxu0 0
  %364 = vmatpush1.bf16.msra.mxu0 0
  %365 = vmatprep.subr.bf16.mxu0 0
  %366 = vmatpush1.bf16.msra.mxu0 0
  %367 = vmatprep.subr.bf16.mxu0 0
  %368 = vmatpush1.bf16.msra.mxu0 0
  %369 = vmatprep.subr.bf16.mxu0 0
  %370 = vmatpush1.bf16.msra.mxu0 0
  %371 = vmatprep.subr.bf16.mxu0 0
  %372 = vmatpush1.bf16.msra.mxu0 0
  %373 = vmatprep.subr.bf16.mxu0 0
  %374 = vmatpush1.bf16.msra.mxu0 0
  %375 = vmatprep.subr.bf16.mxu0 0
  %376 = vmatpush1.bf16.msra.mxu0 0
  %377 = vmatprep.subr.bf16.mxu0 0
  %378 = vmatpush1.bf16.msra.mxu0 0
  %379 = vmatprep.subr.bf16.mxu0 0
  %380 = vmatpush1.bf16.msra.mxu0 0
  %381 = vmatprep.mubr.bf16.mxu0 0
  %382 = vmatmul.mubr.bf16.gmra.mrb[0].mxu0 %v347
  %v383 = vpop.f32.mrb[0].mxu0
  %v384 = vadd.f32 0.0, %v383
  %v385 = vpop.f32.mrb[0].mxu0
  %v386 = vpop.f32.mrb[0].mxu0
  %v387 = vadd.f32 0.0, %v386
  %v388 = vpop.f32.mrb[0].mxu0
  %389 = vdwg.mxu0
  %v390 = vadd.f32 %v314, %v384
  %v391 = vadd.f32 %v315, %v387
  %s392 = scalar_lea.vmem %s1, 80
  %v393 = vld [vmem:[%s392] sm:$0xf]
  %v394 = vld [vmem:[%s392 + $0x4] sm:$0xf]
  %v395 = vld [vmem:[%s392 + $0x8] sm:$0xf]
  %v396 = vld [vmem:[%s392 + $0xc] sm:$0xf]
  %397 = vset.pattern.permute.xlu0 5
  %398 = vperm.xlu0 %397, %v12
  %v399 = vpop.permute.xlu0 %398
  %400 = vset.pattern.permute.xlu0 5
  %401 = vperm.xlu0 %400, %v13
  %v402 = vpop.permute.xlu0 %401
  %vm403 = vcmp.eq.s32.totalorder %v15, %v399
  %vm404 = vcmp.eq.s32.totalorder %v15, %v402
  %v405 = vsel %vm403, 1, 0
  %v406 = vsel %vm404, 1, 0
  %v407 = vcvt.s32.f32 %v405
  %v408 = vcvt.s32.f32 %v406
  %v409 = vpack.c.bf16 %v408, %v407
  %v414 = vunpack.c.l.b16 %v393
  %v415 = vunpack.c.l.b16 %v394
  %v416 = vunpack.c.l.b16 %v395
  %v417 = vunpack.c.l.b16 %v396
  %v418 = vpack.c.b16 %v415, %v414
  %v419 = vpack.c.b16 %v417, %v416
  %v423 = vsel %vm63, %v409, 0
  %425 = vmatprep.subr.bf16.mxu0 0
  %426 = vmatpush1.bf16.msra.mxu0 %v418
  %427 = vmatprep.subr.bf16.mxu0 0
  %428 = vmatpush1.bf16.msra.mxu0 %v419
  %429 = vmatprep.subr.bf16.mxu0 0
  %430 = vmatpush1.bf16.msra.mxu0 0
  %431 = vmatprep.subr.bf16.mxu0 0
  %432 = vmatpush1.bf16.msra.mxu0 0
  %433 = vmatprep.subr.bf16.mxu0 0
  %434 = vmatpush1.bf16.msra.mxu0 0
  %435 = vmatprep.subr.bf16.mxu0 0
  %436 = vmatpush1.bf16.msra.mxu0 0
  %437 = vmatprep.subr.bf16.mxu0 0
  %438 = vmatpush1.bf16.msra.mxu0 0
  %439 = vmatprep.subr.bf16.mxu0 0
  %440 = vmatpush1.bf16.msra.mxu0 0
  %441 = vmatprep.subr.bf16.mxu0 0
  %442 = vmatpush1.bf16.msra.mxu0 0
  %443 = vmatprep.subr.bf16.mxu0 0
  %444 = vmatpush1.bf16.msra.mxu0 0
  %445 = vmatprep.subr.bf16.mxu0 0
  %446 = vmatpush1.bf16.msra.mxu0 0
  %447 = vmatprep.subr.bf16.mxu0 0
  %448 = vmatpush1.bf16.msra.mxu0 0
  %449 = vmatprep.subr.bf16.mxu0 0
  %450 = vmatpush1.bf16.msra.mxu0 0
  %451 = vmatprep.subr.bf16.mxu0 0
  %452 = vmatpush1.bf16.msra.mxu0 0
  %453 = vmatprep.subr.bf16.mxu0 0
  %454 = vmatpush1.bf16.msra.mxu0 0
  %455 = vmatprep.subr.bf16.mxu0 0
  %456 = vmatpush1.bf16.msra.mxu0 0
  %457 = vmatprep.mubr.bf16.mxu0 0
  %458 = vmatmul.mubr.bf16.gmra.mrb[0].mxu0 %v423
  %v459 = vpop.f32.mrb[0].mxu0
  %v460 = vadd.f32 0.0, %v459
  %v461 = vpop.f32.mrb[0].mxu0
  %v462 = vpop.f32.mrb[0].mxu0
  %v463 = vadd.f32 0.0, %v462
  %v464 = vpop.f32.mrb[0].mxu0
  %465 = vdwg.mxu0
  %v466 = vadd.f32 %v390, %v460
  %v467 = vadd.f32 %v391, %v463
  %468 = vst [vmem:[%s2] sm:$0xff] %v466
  %469 = vst [vmem:[%s2 + $0x8] sm:$0xff] %v467
  // Predicated region
  $region10: #{spatial_module_forward.1} parent=0 // pred_check
    _
  $region11: #{spatial_module_forward.1} parent=0 // pred_check_branch
    %471 = sbr.rel (0) target = $region13
  $region12: #{spatial_module_forward.1} parent=0 // pred_region
    _
  $region13: #{spatial_module_forward.1} parent=0 // pred_fallthru
    _
  // Predicated region
  $region14: #{spatial_module_forward.1} parent=0 // pred_check
    _
  $region15: #{spatial_module_forward.1} parent=0 // pred_check_branch
    %473 = sbr.rel (0) target = $region17
  $region16: #{spatial_module_forward.1} parent=0 // pred_region
    _
  $region17: #{spatial_module_forward.1} parent=0 // pred_fallthru
    _

</llo_original>
